<compile_context>
chip_gen: v5e
topology: v5e:2x2
jax: 0.10.0
libtpu: 0.0.40
codegen_flags: <defaults>
</compile_context>

<pallas_src>
import functools

import jax
import jax.numpy as jnp
from jax.experimental import pallas as pl
from jax.experimental.pallas import tpu as pltpu

_LANE = 128
_MAX_TILE_LANES = 4096            # cap spatial tile length (lanes)


def _tpu_vmem_capacity_bytes():
    """Per-core VMEM capacity; conservative fallback if the query is absent."""
    try:
        return int(pltpu.get_tpu_info().vmem_capacity_bytes)
    except Exception:
        return 64 * 1024 * 1024   # v7x per-TC VMEM (smallest current gen)


def _se_block_kernel(x_ref, w1_ref, b1_ref, w2_ref, b2_ref, o_ref, acc_ref, *,
                     hw_true, hw_tile, acc_lanes, num_hw, mask_tail):
    """One (batch-tile, spatial-tile) grid step of the SE block.

    grid = (num_n_tiles, num_hw_tiles); the spatial axis (last) is the
    reduction axis. acc_ref is a lane-shaped f32 accumulator that persists
    across the spatial steps of one batch tile.
    """
    hw_step = pl.program_id(1)
    last = num_hw - 1                       # static
    n_chunks = hw_tile // acc_lanes         # static

    # ---- init accumulator on the first reduction step ----
    @pl.when(hw_step == 0)
    def _init():
        acc_ref[...] = jnp.zeros_like(acc_ref)

    def _accum_unmasked():
        # Chunk-wise loads: per-128-lane slice, cast to f32, straight into the
        # VMEM accumulator. Static slices of a Ref are zero-cost views.
        for k in range(n_chunks):
            c0 = k * acc_lanes
            acc_ref[...] += x_ref[:, :, c0:c0 + acc_lanes].astype(jnp.float32)

    if mask_tail:
        # Steady-state steps never pay for the tail mask.
        @pl.when(hw_step != last)
        def _steady():
            _accum_unmasked()

        @pl.when(hw_step == last)
        def _tail():
            # Last block starts at element offset (num_hw-1)*hw_tile (static).
            valid_last = hw_true - (num_hw - 1) * hw_tile   # in (0, hw_tile)
            for k in range(n_chunks):
                c0 = k * acc_lanes
                c1 = c0 + acc_lanes
                if c1 <= valid_last:
                    # chunk fully in-bounds
                    acc_ref[...] += x_ref[:, :, c0:c1].astype(jnp.float32)
                elif c0 < valid_last:
                    # the single straddling chunk: mask garbage lanes
                    chunk = x_ref[:, :, c0:c1].astype(jnp.float32)
                    lane = jax.lax.broadcasted_iota(jnp.int32, chunk.shape, 2)
                    acc_ref[...] += jnp.where(lane < (valid_last - c0),
                                              chunk, 0.0)
                # else: chunk entirely past hw_true -> skipped at trace time
    else:
        _accum_unmasked()

    # ---- finalize: one cross-lane reduce + tiny MLP + gate + store ----
    @pl.when(hw_step == last)
    def _finalize():
        # Squeeze: finish the global average pool (single XLU reduce + scale).
        pooled = jnp.sum(acc_ref[...], axis=-1) * (1.0 / hw_true)  # (n_tile,C)
        # Excitation: Linear -> ReLU -> Linear, then sigmoid gate.
        h = jnp.dot(pooled, w1_ref[...],
                    preferred_element_type=jnp.float32) + b1_ref[...]
        h = jnp.maximum(h, 0.0)
        z = jnp.dot(h, w2_ref[...],
                    preferred_element_type=jnp.float32) + b2_ref[...]
        o_ref[...] = jax.nn.sigmoid(z).astype(o_ref.dtype)


def _pick_hw_tile(hw, max_lanes):
    """Largest 128-multiple <= min(HW, cap); tail masking handles remainders."""
    if hw <= _LANE:
        return hw                              # single full-extent block
    base = (hw // _LANE) * _LANE               # >= 128
    cap = max(_LANE, (max_lanes // _LANE) * _LANE)
    return min(base, cap)


def se_block(x, w1, b1, w2, b2, *, n_tile=None, hw_tile=None):
    """x: (N, C, H, W); returns (N, C) gate values (matches PyTorch forward)."""
    N, C, H, W = x.shape
    HW = H * W
    Hc = w1.shape[1]
    itemsize = x.dtype.itemsize

    x_flat = x.reshape(N, C, HW)
    b1_2d = b1.reshape(1, Hc)
    b2_2d = b2.reshape(1, C)

    # ---- per-generation VMEM budgets -------------------------------------
    vmem_cap = _tpu_vmem_capacity_bytes()
    # Double-buffered x tile budget: v5e/v6e (128 MiB) -> 24 MiB,
    # v7x (64 MiB per TC) -> 16 MiB (8 MiB of x per step).
    x_budget = min(24 * 1024 * 1024, vmem_cap // 4)
    vmem_limit = min(96 * 1024 * 1024, (vmem_cap * 3) // 4)

    # ---- tile selection: grow hw_tile (contiguous HBM axis) first ---------
    n_est = min(N, 8)
    if hw_tile is None:
        max_lanes = x_budget // max(2 * n_est * C * itemsize, 1)
        max_lanes = max(_LANE, min(_MAX_TILE_LANES,
                                   (max_lanes // _LANE) * _LANE))
        hw_tile = _pick_hw_tile(HW, max_lanes)
    if n_tile is None:
        max_rows = x_budget // max(2 * C * hw_tile * itemsize, 1)
        if N <= max_rows:
            n_tile = N
        elif max_rows >= 8:
            n_tile = (max_rows // 8) * 8      # keep output block sublane-aligned
        else:
            n_tile = min(N, 8)
    n_tile = min(n_tile, N)

    # Ensure >= 2 blocks on the "parallel" batch axis when the batch is large
    # enough to keep sublane-aligned output blocks: lets v7x shard the grid
    # across both TensorCores; negligible per-step overhead on 1-TC chips.
    if n_tile == N and N >= 16:
        n_tile = ((pl.cdiv(N, 2) + 7) // 8) * 8

    num_n = pl.cdiv(N, n_tile)
    num_hw = pl.cdiv(HW, hw_tile)
    mask_tail = (HW % hw_tile) != 0
    acc_lanes = min(hw_tile, _LANE)

    kernel = functools.partial(
        _se_block_kernel, hw_true=HW, hw_tile=hw_tile,
        acc_lanes=acc_lanes, num_hw=num_hw, mask_tail=mask_tail)

    grid_spec = pltpu.PrefetchScalarGridSpec(
        num_scalar_prefetch=0,
        grid=(num_n, num_hw),                          # reduction axis last
        in_specs=[
            pl.BlockSpec((n_tile, C, hw_tile), lambda n, hw: (n, 0, hw)),
            # Tiny MLP weights/biases: constant block index => DMA'd once and
            # VMEM-resident across the whole grid.
            pl.BlockSpec((C, Hc), lambda n, hw: (0, 0)),
            pl.BlockSpec((1, Hc), lambda n, hw: (0, 0)),
            pl.BlockSpec((Hc, C), lambda n, hw: (0, 0)),
            pl.BlockSpec((1, C), lambda n, hw: (0, 0)),
        ],
        out_specs=pl.BlockSpec((n_tile, C), lambda n, hw: (n, 0)),
        scratch_shapes=[pltpu.VMEM((n_tile, C, acc_lanes), jnp.float32)],
    )

    # TODO(synk): if the caller immediately applies the gate (x * sigmoid),
    # fuse that channel-scale into the consumer to avoid re-streaming x.
    return pl.pallas_call(
        kernel,
        out_shape=jax.ShapeDtypeStruct((N, C), x.dtype),
        grid_spec=grid_spec,
        compiler_params=pltpu.CompilerParams(
            dimension_semantics=("parallel", "arbitrary"),
            vmem_limit_bytes=vmem_limit),
    )(x_flat, w1, b1_2d, w2, b2_2d)


def se_block_reference(x, w1, b1, w2, b2):
    pooled = jnp.mean(x.astype(jnp.float32), axis=(2, 3))
    h = jnp.maximum(pooled @ w1 + b1, 0.0)
    return jax.nn.sigmoid(h @ w2 + b2).astype(x.dtype)


if __name__ == "__main__":
    def make_case(key, N, C, H, W, r):
        Hc = max(C // r, 1)
        kx, k1, k2, k3, k4 = jax.random.split(key, 5)
        bound1 = 1.0 / (C ** 0.5)
        bound2 = 1.0 / (Hc ** 0.5)
        x = jax.random.normal(kx, (N, C, H, W), dtype=jnp.float32)
        w1 = jax.random.uniform(k1, (C, Hc), jnp.float32, -bound1, bound1)
        b1 = jax.random.uniform(k2, (Hc,), jnp.float32, -bound1, bound1)
        w2 = jax.random.uniform(k3, (Hc, C), jnp.float32, -bound2, bound2)
        b2 = jax.random.uniform(k4, (C,), jnp.float32, -bound2, bound2)
        return x, w1, b1, w2, b2

    keys = jax.random.split(jax.random.PRNGKey(0), 4)

    # Case 1: toy SE block (HW = 64 < 128 -> single full-extent spatial block).
    x, w1, b1, w2, b2 = make_case(keys[0], 2, 64, 8, 8, 16)
    out = se_block(x, w1, b1, w2, b2)
    jax.block_until_ready(out)
    ref = se_block_reference(x, w1, b1, w2, b2)
    assert out.shape == ref.shape
    assert jnp.allclose(out, ref, atol=1e-5, rtol=1e-5), "case 1 mismatch"

    # Case 2: multi-step spatial reduction (HW = 256, forced 128-lane tiles)
    # exercising the accumulator + pl.when finalize path.
    x, w1, b1, w2, b2 = make_case(keys[1], 3, 64, 16, 16, 16)
    out = se_block(x, w1, b1, w2, b2, hw_tile=128)
    jax.block_until_ready(out)
    ref = se_block_reference(x, w1, b1, w2, b2)
    assert jnp.allclose(out, ref, atol=1e-5, rtol=1e-5), "case 2 mismatch"

    # Case 3: uneven spatial extent (HW = 144 -> masked tail confined to the
    # last spatial step).
    x, w1, b1, w2, b2 = make_case(keys[2], 2, 32, 12, 12, 16)
    out = se_block(x, w1, b1, w2, b2)
    jax.block_until_ready(out)
    ref = se_block_reference(x, w1, b1, w2, b2)
    assert jnp.allclose(out, ref, atol=1e-5, rtol=1e-5), "case 3 mismatch"

    # Case 4: larger batch (N = 16) -> forced >= 2 batch blocks (2-TC sharding
    # path) together with a masked spatial tail.
    x, w1, b1, w2, b2 = make_case(keys[3], 16, 32, 12, 12, 16)
    out = se_block(x, w1, b1, w2, b2)
    jax.block_until_ready(out)
    ref = se_block_reference(x, w1, b1, w2, b2)
    assert jnp.allclose(out, ref, atol=1e-5, rtol=1e-5), "case 4 mismatch"

    print("KERNEL_OK")
</pallas_src>

<mosaic_0001>
module attributes {stable_mosaic.version = 11 : i64} {
  func.func @_se_block_kernel(%arg0: i32, %arg1: i32, %arg2: memref<2x64x64xf32, #tpu.memory_space<vmem>>, %arg3: memref<64x4xf32, #tpu.memory_space<vmem>>, %arg4: memref<1x4xf32, #tpu.memory_space<vmem>>, %arg5: memref<4x64xf32, #tpu.memory_space<vmem>>, %arg6: memref<1x64xf32, #tpu.memory_space<vmem>>, %arg7: memref<2x64xf32, #tpu.memory_space<vmem>>, %arg8: memref<2x64x64xf32, #tpu.memory_space<vmem>>) attributes {dimension_semantics = [#tpu.dimension_semantics<parallel>, #tpu.dimension_semantics<arbitrary>], iteration_bounds = array<i64: 1, 1>, scalar_prefetch = 0 : i64, scratch_operands = 1 : i64, tpu.core_type = #tpu.core_type<tc>, window_params = [{transform_indices = @transform_0, window_bounds = array<i64: 2, 64, 64>}, {pipeline_mode = #tpu.pipeline_mode<synchronous>, transform_indices = @transform_1, window_bounds = array<i64: 64, 4>}, {pipeline_mode = #tpu.pipeline_mode<synchronous>, transform_indices = @transform_2, window_bounds = array<i64: 1, 4>}, {pipeline_mode = #tpu.pipeline_mode<synchronous>, transform_indices = @transform_3, window_bounds = array<i64: 4, 64>}, {pipeline_mode = #tpu.pipeline_mode<synchronous>, transform_indices = @transform_4, window_bounds = array<i64: 1, 64>}, {transform_indices = @transform_5, window_bounds = array<i64: 2, 64>}]} {
    %c0_i32 = arith.constant 0 : i32
    %0 = arith.cmpi eq, %arg1, %c0_i32 : i32
    %1 = arith.extui %0 : i1 to i32
    %c0_i32_0 = arith.constant 0 : i32
    %2 = arith.cmpi ne, %1, %c0_i32_0 : i32
    scf.if %2 {
      %cst = arith.constant 0.000000e+00 : f32
      %10 = vector.broadcast %cst : f32 to vector<2x64x64xf32>
      %c0_11 = arith.constant 0 : index
      %c0_12 = arith.constant 0 : index
      %c0_13 = arith.constant 0 : index
      %11 = vector.load %arg8[%c0_11, %c0_12, %c0_13] : memref<2x64x64xf32, #tpu.memory_space<vmem>>, vector<2x64x64xf32>
      tpu.vector_store %arg8[%c0_11, %c0_12, %c0_13], %10 {strides = array<i32>} : memref<2x64x64xf32, #tpu.memory_space<vmem>>, vector<2x64x64xf32>,
    } else {
    }
    %c0 = arith.constant 0 : index
    %c0_1 = arith.constant 0 : index
    %c0_2 = arith.constant 0 : index
    %3 = vector.load %arg8[%c0, %c0_1, %c0_2] : memref<2x64x64xf32, #tpu.memory_space<vmem>>, vector<2x64x64xf32>
    %c0_3 = arith.constant 0 : index
    %c0_4 = arith.constant 0 : index
    %c0_5 = arith.constant 0 : index
    %4 = vector.load %arg2[%c0_3, %c0_4, %c0_5] : memref<2x64x64xf32, #tpu.memory_space<vmem>>, vector<2x64x64xf32>
    %5 = arith.addf %3, %4 : vector<2x64x64xf32>
    %c0_6 = arith.constant 0 : index
    %c0_7 = arith.constant 0 : index
    %c0_8 = arith.constant 0 : index
    %6 = vector.load %arg8[%c0_6, %c0_7, %c0_8] : memref<2x64x64xf32, #tpu.memory_space<vmem>>, vector<2x64x64xf32>
    tpu.vector_store %arg8[%c0_6, %c0_7, %c0_8], %5 {strides = array<i32>} : memref<2x64x64xf32, #tpu.memory_space<vmem>>, vector<2x64x64xf32>,
    %c0_i32_9 = arith.constant 0 : i32
    %7 = arith.cmpi eq, %arg1, %c0_i32_9 : i32
    %8 = arith.extui %7 : i1 to i32
    %c0_i32_10 = arith.constant 0 : i32
    %9 = arith.cmpi ne, %8, %c0_i32_10 : i32
    scf.if %9 {
      %c0_11 = arith.constant 0 : index
      %c0_12 = arith.constant 0 : index
      %c0_13 = arith.constant 0 : index
      %10 = vector.load %arg8[%c0_11, %c0_12, %c0_13] : memref<2x64x64xf32, #tpu.memory_space<vmem>>, vector<2x64x64xf32>
      %cst = arith.constant dense<0.000000e+00> : vector<2x64xf32>
      %11 = vector.multi_reduction <add>, %10, %cst [2] : vector<2x64x64xf32> to vector<2x64xf32>
      %cst_14 = arith.constant 1.562500e-02 : f32
      %12 = vector.broadcast %cst_14 : f32 to vector<2x64xf32>
      %13 = arith.mulf %11, %12 : vector<2x64xf32>
      %c0_15 = arith.constant 0 : index
      %c0_16 = arith.constant 0 : index
      %14 = vector.load %arg3[%c0_15, %c0_16] : memref<64x4xf32, #tpu.memory_space<vmem>>, vector<64x4xf32>
      %cst_17 = arith.constant dense<0.000000e+00> : vector<2x4xf32>
      %15 = tpu.matmul %13, %14, %cst_17 {dimension_numbers = #tpu.dot_dimension_numbers<[1], [0], [0], [1], [0, 0, 1, 1], [], []>} : vector<2x64xf32>, vector<64x4xf32>, vector<2x4xf32> -> vector<2x4xf32>
      %c0_18 = arith.constant 0 : index
      %c0_19 = arith.constant 0 : index
      %16 = vector.load %arg4[%c0_18, %c0_19] : memref<1x4xf32, #tpu.memory_space<vmem>>, vector<1x4xf32>
      %17 = vector.broadcast %16 : vector<1x4xf32> to vector<2x4xf32>
      %18 = arith.addf %15, %17 : vector<2x4xf32>
      %cst_20 = arith.constant 0.000000e+00 : f32
      %19 = vector.broadcast %cst_20 : f32 to vector<2x4xf32>
      %20 = arith.maximumf %18, %19 : vector<2x4xf32>
      %c0_21 = arith.constant 0 : index
      %c0_22 = arith.constant 0 : index
      %21 = vector.load %arg5[%c0_21, %c0_22] : memref<4x64xf32, #tpu.memory_space<vmem>>, vector<4x64xf32>
      %cst_23 = arith.constant dense<0.000000e+00> : vector<2x64xf32>
      %22 = tpu.matmul %20, %21, %cst_23 {dimension_numbers = #tpu.dot_dimension_numbers<[1], [0], [0], [1], [0, 0, 1, 1], [], []>} : vector<2x4xf32>, vector<4x64xf32>, vector<2x64xf32> -> vector<2x64xf32>
      %c0_24 = arith.constant 0 : index
      %c0_25 = arith.constant 0 : index
      %23 = vector.load %arg6[%c0_24, %c0_25] : memref<1x64xf32, #tpu.memory_space<vmem>>, vector<1x64xf32>
      %24 = vector.broadcast %23 : vector<1x64xf32> to vector<2x64xf32>
      %25 = arith.addf %22, %24 : vector<2x64xf32>
      %26 = arith.negf %25 : vector<2x64xf32>
      %27 = math.exp %26 : vector<2x64xf32>
      %cst_26 = arith.constant 1.000000e+00 : f32
      %28 = vector.broadcast %cst_26 : f32 to vector<2x64xf32>
      %29 = arith.addf %28, %27 : vector<2x64xf32>
      %30 = arith.divf %28, %29 : vector<2x64xf32>
      %c0_27 = arith.constant 0 : index
      %c0_28 = arith.constant 0 : index
      %31 = vector.load %arg7[%c0_27, %c0_28] : memref<2x64xf32, #tpu.memory_space<vmem>>, vector<2x64xf32>
      tpu.vector_store %arg7[%c0_27, %c0_28], %30 {strides = array<i32>} : memref<2x64xf32, #tpu.memory_space<vmem>>, vector<2x64xf32>,
    } else {
    }
    return
  }
  func.func @transform_0(%arg0: i32, %arg1: i32) -> (i32, i32, i32) {
    %c0_i32 = arith.constant 0 : i32
    %c0_i32_0 = arith.constant 0 : i32
    return %arg0, %c0_i32, %arg1 : i32, i32, i32
  }
  func.func @transform_1(%arg0: i32, %arg1: i32) -> (i32, i32) {
    %c0_i32 = arith.constant 0 : i32
    %c0_i32_0 = arith.constant 0 : i32
    %c0_i32_1 = arith.constant 0 : i32
    return %c0_i32, %c0_i32_0 : i32, i32
  }
  func.func @transform_2(%arg0: i32, %arg1: i32) -> (i32, i32) {
    %c0_i32 = arith.constant 0 : i32
    %c0_i32_0 = arith.constant 0 : i32
    %c0_i32_1 = arith.constant 0 : i32
    return %c0_i32, %c0_i32_0 : i32, i32
  }
  func.func @transform_3(%arg0: i32, %arg1: i32) -> (i32, i32) {
    %c0_i32 = arith.constant 0 : i32
    %c0_i32_0 = arith.constant 0 : i32
    %c0_i32_1 = arith.constant 0 : i32
    return %c0_i32, %c0_i32_0 : i32, i32
  }
  func.func @transform_4(%arg0: i32, %arg1: i32) -> (i32, i32) {
    %c0_i32 = arith.constant 0 : i32
    %c0_i32_0 = arith.constant 0 : i32
    %c0_i32_1 = arith.constant 0 : i32
    return %c0_i32, %c0_i32_0 : i32, i32
  }
  func.func @transform_5(%arg0: i32, %arg1: i32) -> (i32, i32) {
    %c0_i32 = arith.constant 0 : i32
    %c0_i32_0 = arith.constant 0 : i32
    return %arg0, %c0_i32 : i32, i32
  }
}

</mosaic_0001>

<llo_original>
// kernel: tpu_custom_call.1
$region0: #{tpu_custom_call.1}
  #allocation0 [shape = 'u32[]', space=smem, size = 0x4, offset = 0x4, fixed_abs, tag = 'smem constant byte address 0x4 - core index']
  #allocation1 [shape = 'u32[72,128]{1,0:T(1,128)}', space=vmem, size = 0x9000, scoped, tag = 'internal scratch']
  #allocation2 [shape = 'f32[2,64,64]{2,1,0:T(8,128)}', space=vmem, size = 0x10000, scoped, tag = 'scratch operand']
  %s0 = inlined_call_operand.hbm [shape: f32[2,64,64], index: 0, kind: input, shape index: {}]
  %s1 = inlined_call_operand.vmem [shape: f32[64,4], index: 1, kind: input, shape index: {}]
  %s2 = inlined_call_operand.vmem [shape: f32[1,4], index: 2, kind: input, shape index: {}]
  %s3 = inlined_call_operand.vmem [shape: f32[4,64], index: 3, kind: input, shape index: {}]
  %s4 = inlined_call_operand.vmem [shape: f32[1,64], index: 4, kind: input, shape index: {}]
  %s5 = inlined_call_operand.hbm [shape: f32[2,64], index: 5, kind: output, shape index: {}]
  %s6 = sld [smem:[#allocation0]]
  $region42: #{tpu_custom_call.1} parent=0
    _
  %s8 = ssub.s32 1, %s6
  %s9 = scalar_select 0, %s8, %s6
  $region1: #{tpu_custom_call.1} parent=0
    #allocation3 [shape = 'u8[65536]{0}', space=vmem, size = 0x10000, scoped, tag = 'input window, operand 0, single buffered']
    #allocation4 [shape = 's32[1]{0}', space=sflag, size = 0x4, scoped, tag = 'scoped memory for tpu_custom_call.1']
    #allocation5 [shape = 's32[1]{0}', space=sflag, size = 0x4, scoped, tag = 'scoped memory for tpu_custom_call.1']
    #allocation6 [shape = 'u8[1024]{0}', space=vmem, size = 0x400, scoped, tag = 'output window, operand 0, single buffered']
    %10 = vsyncpa [#allocation4], 0
    %11 = vsyncpa [#allocation5], 0
    // Predicated region
    $region2: #{tpu_custom_call.1} parent=1 // pred_check
      _
    $region3: #{tpu_custom_call.1} parent=1 // pred_check_branch
      %13 = sbr.rel (0) target = $region5
    $region4: #{tpu_custom_call.1} parent=1 // pred_region
      %15 = vsyncadd [#allocation4], 0
      %s16 = sshll.u32 %s0, 4
      %s17 = int_to_ptr.hbm [resolvable:$true] %s16
      %s18 = sshll.u32 [#allocation3], 4
      %s19 = int_to_ptr.vmem [resolvable:$true] %s18
      %24 = dma.hbm_to_vmem [thread:$0]  %s17, 2048, %s19, [#allocation4], 128, 128, 8
    $region5: #{tpu_custom_call.1} parent=1 // pred_fallthru
      _
    // Predicated region
    $region6: #{tpu_custom_call.1} parent=1 // pred_check
      _
    $region7: #{tpu_custom_call.1} parent=1 // pred_check_branch
      %26 = sbr.rel (0) target = $region9
    $region8: #{tpu_custom_call.1} parent=1 // pred_region
      _
    $region9: #{tpu_custom_call.1} parent=1 // pred_fallthru
      _
    // Predicated region
    $region10: #{tpu_custom_call.1} parent=1 // pred_check
      _
    $region11: #{tpu_custom_call.1} parent=1 // pred_check_branch
      %28 = sbr.rel (0) target = $region13
    $region12: #{tpu_custom_call.1} parent=1 // pred_region
      _
    $region13: #{tpu_custom_call.1} parent=1 // pred_fallthru
      _
    // Predicated region
    $region14: #{tpu_custom_call.1} parent=1 // pred_check
      _
    $region15: #{tpu_custom_call.1} parent=1 // pred_check_branch
      %30 = sbr.rel (0) target = $region17
    $region16: #{tpu_custom_call.1} parent=1 // pred_region
      _
    $region17: #{tpu_custom_call.1} parent=1 // pred_fallthru
      _
    // Predicated region
    $region18: #{tpu_custom_call.1} parent=1 // pred_check
      _
    $region19: #{tpu_custom_call.1} parent=1 // pred_check_branch
      %32 = sbr.rel (0) target = $region21
    $region20: #{tpu_custom_call.1} parent=1 // pred_region
      _
    $region21: #{tpu_custom_call.1} parent=1 // pred_fallthru
      _
    // Predicated region
    $region22: #{tpu_custom_call.1} parent=1 // pred_check
      _
    $region23: #{tpu_custom_call.1} parent=1 // pred_check_branch
      %34 = sbr.rel (0) target = $region25
    $region24: #{tpu_custom_call.1} parent=1 // pred_region
      %36 = dma.done [#allocation4], 2048
    $region25: #{tpu_custom_call.1} parent=1 // pred_fallthru
      _
    %p37 = scmp.eq.s32.totalorder 0, 0
    // Predicated region
    $region26: #{tpu_custom_call.1} parent=1 // pred_check
      %p38 = pneg %p37
    $region27: #{tpu_custom_call.1} parent=1 // pred_check_branch
      %40 = sbr.rel (%p38) target = $region29
    $region28: #{tpu_custom_call.1} parent=1 // pred_region
      %vm41 = vcmask 523264
      %42 = vst.msk [vmem:[#allocation2] sm:$0xff] %vm41, 0.0
      %43 = vst.msk [vmem:[#allocation2 + $0x8] sm:$0xff] %vm41, 0.0
      %44 = vst.msk [vmem:[#allocation2 + $0x10] sm:$0xff] %vm41, 0.0
      %45 = vst.msk [vmem:[#allocation2 + $0x18] sm:$0xff] %vm41, 0.0
      %46 = vst.msk [vmem:[#allocation2 + $0x20] sm:$0xff] %vm41, 0.0
      %47 = vst.msk [vmem:[#allocation2 + $0x28] sm:$0xff] %vm41, 0.0
      %48 = vst.msk [vmem:[#allocation2 + $0x30] sm:$0xff] %vm41, 0.0
      %49 = vst.msk [vmem:[#allocation2 + $0x38] sm:$0xff] %vm41, 0.0
      %50 = vst.msk [vmem:[#allocation2 + $0x40] sm:$0xff] %vm41, 0.0
      %51 = vst.msk [vmem:[#allocation2 + $0x48] sm:$0xff] %vm41, 0.0
      %52 = vst.msk [vmem:[#allocation2 + $0x50] sm:$0xff] %vm41, 0.0
      %53 = vst.msk [vmem:[#allocation2 + $0x58] sm:$0xff] %vm41, 0.0
      %54 = vst.msk [vmem:[#allocation2 + $0x60] sm:$0xff] %vm41, 0.0
      %55 = vst.msk [vmem:[#allocation2 + $0x68] sm:$0xff] %vm41, 0.0
      %56 = vst.msk [vmem:[#allocation2 + $0x70] sm:$0xff] %vm41, 0.0
      %57 = vst.msk [vmem:[#allocation2 + $0x78] sm:$0xff] %vm41, 0.0
    $region29: #{tpu_custom_call.1} parent=1 // pred_fallthru
      _
    %v58 = vld [vmem:[#allocation2] sm:$0xff]
    %v59 = vld [vmem:[#allocation2 + $0x8] sm:$0xff]
    %v60 = vld [vmem:[#allocation2 + $0x10] sm:$0xff]
    %v61 = vld [vmem:[#allocation2 + $0x18] sm:$0xff]
    %v62 = vld [vmem:[#allocation2 + $0x20] sm:$0xff]
    %v63 = vld [vmem:[#allocation2 + $0x28] sm:$0xff]
    %v64 = vld [vmem:[#allocation2 + $0x30] sm:$0xff]
    %v65 = vld [vmem:[#allocation2 + $0x38] sm:$0xff]
    %v66 = vld [vmem:[#allocation2 + $0x40] sm:$0xff]
    %v67 = vld [vmem:[#allocation2 + $0x48] sm:$0xff]
    %v68 = vld [vmem:[#allocation2 + $0x50] sm:$0xff]
    %v69 = vld [vmem:[#allocation2 + $0x58] sm:$0xff]
    %v70 = vld [vmem:[#allocation2 + $0x60] sm:$0xff]
    %v71 = vld [vmem:[#allocation2 + $0x68] sm:$0xff]
    %v72 = vld [vmem:[#allocation2 + $0x70] sm:$0xff]
    %v73 = vld [vmem:[#allocation2 + $0x78] sm:$0xff]
    %v74 = vld [vmem:[#allocation3] sm:$0xff]
    %v75 = vld [vmem:[#allocation3 + $0x8] sm:$0xff]
    %v76 = vld [vmem:[#allocation3 + $0x10] sm:$0xff]
    %v77 = vld [vmem:[#allocation3 + $0x18] sm:$0xff]
    %v78 = vld [vmem:[#allocation3 + $0x20] sm:$0xff]
    %v79 = vld [vmem:[#allocation3 + $0x28] sm:$0xff]
    %v80 = vld [vmem:[#allocation3 + $0x30] sm:$0xff]
    %v81 = vld [vmem:[#allocation3 + $0x38] sm:$0xff]
    %v82 = vld [vmem:[#allocation3 + $0x40] sm:$0xff]
    %v83 = vld [vmem:[#allocation3 + $0x48] sm:$0xff]
    %v84 = vld [vmem:[#allocation3 + $0x50] sm:$0xff]
    %v85 = vld [vmem:[#allocation3 + $0x58] sm:$0xff]
    %v86 = vld [vmem:[#allocation3 + $0x60] sm:$0xff]
    %v87 = vld [vmem:[#allocation3 + $0x68] sm:$0xff]
    %v88 = vld [vmem:[#allocation3 + $0x70] sm:$0xff]
    %v89 = vld [vmem:[#allocation3 + $0x78] sm:$0xff]
    %v90 = vadd.f32 %v58, %v74
    %v91 = vadd.f32 %v59, %v75
    %v92 = vadd.f32 %v60, %v76
    %v93 = vadd.f32 %v61, %v77
    %v94 = vadd.f32 %v62, %v78
    %v95 = vadd.f32 %v63, %v79
    %v96 = vadd.f32 %v64, %v80
    %v97 = vadd.f32 %v65, %v81
    %v98 = vadd.f32 %v66, %v82
    %v99 = vadd.f32 %v67, %v83
    %v100 = vadd.f32 %v68, %v84
    %v101 = vadd.f32 %v69, %v85
    %v102 = vadd.f32 %v70, %v86
    %v103 = vadd.f32 %v71, %v87
    %v104 = vadd.f32 %v72, %v88
    %v105 = vadd.f32 %v73, %v89
    %vm106 = vcmask 523264
    %107 = vst.msk [vmem:[#allocation2] sm:$0xff] %vm106, %v90
    %108 = vst.msk [vmem:[#allocation2 + $0x8] sm:$0xff] %vm106, %v91
    %109 = vst.msk [vmem:[#allocation2 + $0x10] sm:$0xff] %vm106, %v92
    %110 = vst.msk [vmem:[#allocation2 + $0x18] sm:$0xff] %vm106, %v93
    %111 = vst.msk [vmem:[#allocation2 + $0x20] sm:$0xff] %vm106, %v94
    %112 = vst.msk [vmem:[#allocation2 + $0x28] sm:$0xff] %vm106, %v95
    %113 = vst.msk [vmem:[#allocation2 + $0x30] sm:$0xff] %vm106, %v96
    %114 = vst.msk [vmem:[#allocation2 + $0x38] sm:$0xff] %vm106, %v97
    %115 = vst.msk [vmem:[#allocation2 + $0x40] sm:$0xff] %vm106, %v98
    %116 = vst.msk [vmem:[#allocation2 + $0x48] sm:$0xff] %vm106, %v99
    %117 = vst.msk [vmem:[#allocation2 + $0x50] sm:$0xff] %vm106, %v100
    %118 = vst.msk [vmem:[#allocation2 + $0x58] sm:$0xff] %vm106, %v101
    %119 = vst.msk [vmem:[#allocation2 + $0x60] sm:$0xff] %vm106, %v102
    %120 = vst.msk [vmem:[#allocation2 + $0x68] sm:$0xff] %vm106, %v103
    %121 = vst.msk [vmem:[#allocation2 + $0x70] sm:$0xff] %vm106, %v104
    %122 = vst.msk [vmem:[#allocation2 + $0x78] sm:$0xff] %vm106, %v105
    // Predicated region
    $region30: #{tpu_custom_call.1} parent=1 // pred_check
      %p123 = pneg %p37
    $region31: #{tpu_custom_call.1} parent=1 // pred_check_branch
      %125 = sbr.rel (%p123) target = $region33
    $region32: #{tpu_custom_call.1} parent=1 // pred_region
      %v126 = vld [vmem:[#allocation2] sm:$0xff]
      %v127 = vld [vmem:[#allocation2 + $0x8] sm:$0xff]
      %v128 = vld [vmem:[#allocation2 + $0x10] sm:$0xff]
      %v129 = vld [vmem:[#allocation2 + $0x18] sm:$0xff]
      %v130 = vld [vmem:[#allocation2 + $0x20] sm:$0xff]
      %v131 = vld [vmem:[#allocation2 + $0x28] sm:$0xff]
      %v132 = vld [vmem:[#allocation2 + $0x30] sm:$0xff]
      %v133 = vld [vmem:[#allocation2 + $0x38] sm:$0xff]
      %v134 = vld [vmem:[#allocation2 + $0x40] sm:$0xff]
      %v135 = vld [vmem:[#allocation2 + $0x48] sm:$0xff]
      %v136 = vld [vmem:[#allocation2 + $0x50] sm:$0xff]
      %v137 = vld [vmem:[#allocation2 + $0x58] sm:$0xff]
      %v138 = vld [vmem:[#allocation2 + $0x60] sm:$0xff]
      %v139 = vld [vmem:[#allocation2 + $0x68] sm:$0xff]
      %v140 = vld [vmem:[#allocation2 + $0x70] sm:$0xff]
      %v141 = vld [vmem:[#allocation2 + $0x78] sm:$0xff]
      %v142 = vsel %vm106, %v126, 0.0
      %143 = vadd.xlane.f32.xlu0 %v142
      %v144 = vpop.xlane.xlu0 %143
      %v145 = vsel %vm106, %v127, 0.0
      %146 = vadd.xlane.f32.xlu0 %v145
      %v147 = vpop.xlane.xlu0 %146
      %v148 = vsel %vm106, %v128, 0.0
      %149 = vadd.xlane.f32.xlu0 %v148
      %v150 = vpop.xlane.xlu0 %149
      %v151 = vsel %vm106, %v129, 0.0
      %152 = vadd.xlane.f32.xlu0 %v151
      %v153 = vpop.xlane.xlu0 %152
      %v154 = vsel %vm106, %v130, 0.0
      %155 = vadd.xlane.f32.xlu0 %v154
      %v156 = vpop.xlane.xlu0 %155
      %v157 = vsel %vm106, %v131, 0.0
      %158 = vadd.xlane.f32.xlu0 %v157
      %v159 = vpop.xlane.xlu0 %158
      %v160 = vsel %vm106, %v132, 0.0
      %161 = vadd.xlane.f32.xlu0 %v160
      %v162 = vpop.xlane.xlu0 %161
      %v163 = vsel %vm106, %v133, 0.0
      %164 = vadd.xlane.f32.xlu0 %v163
      %v165 = vpop.xlane.xlu0 %164
      %v166 = vsel %vm106, %v134, 0.0
      %167 = vadd.xlane.f32.xlu0 %v166
      %v168 = vpop.xlane.xlu0 %167
      %v169 = vsel %vm106, %v135, 0.0
      %170 = vadd.xlane.f32.xlu0 %v169
      %v171 = vpop.xlane.xlu0 %170
      %v172 = vsel %vm106, %v136, 0.0
      %173 = vadd.xlane.f32.xlu0 %v172
      %v174 = vpop.xlane.xlu0 %173
      %v175 = vsel %vm106, %v137, 0.0
      %176 = vadd.xlane.f32.xlu0 %v175
      %v177 = vpop.xlane.xlu0 %176
      %v178 = vsel %vm106, %v138, 0.0
      %179 = vadd.xlane.f32.xlu0 %v178
      %v180 = vpop.xlane.xlu0 %179
      %v181 = vsel %vm106, %v139, 0.0
      %182 = vadd.xlane.f32.xlu0 %v181
      %v183 = vpop.xlane.xlu0 %182
      %v184 = vsel %vm106, %v140, 0.0
      %185 = vadd.xlane.f32.xlu0 %v184
      %v186 = vpop.xlane.xlu0 %185
      %v187 = vsel %vm106, %v141, 0.0
      %188 = vadd.xlane.f32.xlu0 %v187
      %v189 = vpop.xlane.xlu0 %188
      %v190 = vmul.f32 %v144, 0.015625
      %v191 = vmul.f32 %v147, 0.015625
      %v192 = vmul.f32 %v150, 0.015625
      %v193 = vmul.f32 %v153, 0.015625
      %v194 = vmul.f32 %v156, 0.015625
      %v195 = vmul.f32 %v159, 0.015625
      %v196 = vmul.f32 %v162, 0.015625
      %v197 = vmul.f32 %v165, 0.015625
      %v198 = vmul.f32 %v168, 0.015625
      %v199 = vmul.f32 %v171, 0.015625
      %v200 = vmul.f32 %v174, 0.015625
      %v201 = vmul.f32 %v177, 0.015625
      %v202 = vmul.f32 %v180, 0.015625
      %v203 = vmul.f32 %v183, 0.015625
      %v204 = vmul.f32 %v186, 0.015625
      %v205 = vmul.f32 %v189, 0.015625
      %v206 = vld [vmem:[%s1] sm:$0xff]
      %v207 = vld [vmem:[%s1 + $0x8] sm:$0xff]
      %v208 = vld [vmem:[%s1 + $0x10] sm:$0xff]
      %v209 = vld [vmem:[%s1 + $0x18] sm:$0xff]
      %v210 = vld [vmem:[%s1 + $0x20] sm:$0xff]
      %v211 = vld [vmem:[%s1 + $0x28] sm:$0xff]
      %v212 = vld [vmem:[%s1 + $0x30] sm:$0xff]
      %v213 = vld [vmem:[%s1 + $0x38] sm:$0xff]
      %v214 = vld [vmem:[%s2] sm:$0x1]
      %v216 = vperm.slane %v214, 0
      %v234 = vlaneseq
      %v235 = vand.u32 %v234, 127
      %v236 = vperm.slane %v190, %v235
      %v237 = vadd.s32 %v235, 4294967288
      %v238 = vperm.slane %v191, %v237
      %vm239 = vcmask 130112
      %v240 = vsel %vm239, %v238, %v236
      %v241 = vadd.s32 %v235, 4294967280
      %v242 = vperm.slane %v192, %v241
      %vm243 = vcmask 195712
      %v244 = vsel %vm243, %v242, %v240
      %v245 = vadd.s32 %v235, 4294967272
      %v246 = vperm.slane %v193, %v245
      %vm247 = vcmask 261312
      %v248 = vsel %vm247, %v246, %v244
      %v249 = vadd.s32 %v235, 4294967264
      %v250 = vperm.slane %v194, %v249
      %vm251 = vcmask 326912
      %v252 = vsel %vm251, %v250, %v248
      %v253 = vadd.s32 %v235, 4294967256
      %v254 = vperm.slane %v195, %v253
      %vm255 = vcmask 392512
      %v256 = vsel %vm255, %v254, %v252
      %v257 = vadd.s32 %v235, 4294967248
      %v258 = vperm.slane %v196, %v257
      %vm259 = vcmask 458112
      %v260 = vsel %vm259, %v258, %v256
      %v261 = vadd.s32 %v235, 4294967240
      %v262 = vperm.slane %v197, %v261
      %vm263 = vcmask 523712
      %v264 = vsel %vm263, %v262, %v260
      %v265 = vperm.slane %v198, %v235
      %v266 = vperm.slane %v199, %v237
      %v267 = vsel %vm239, %v266, %v265
      %v268 = vperm.slane %v200, %v241
      %v269 = vsel %vm243, %v268, %v267
      %v270 = vperm.slane %v201, %v245
      %v271 = vsel %vm247, %v270, %v269
      %v272 = vperm.slane %v202, %v249
      %v273 = vsel %vm251, %v272, %v271
      %v274 = vperm.slane %v203, %v253
      %v275 = vsel %vm255, %v274, %v273
      %v276 = vperm.slane %v204, %v257
      %v277 = vsel %vm259, %v276, %v275
      %v278 = vperm.slane %v205, %v261
      %v279 = vsel %vm263, %v278, %v277
      %vm280 = vcmask 1041409
      %v281 = vsel %vm280, %v279, %v264
      %v282 = vsel %vm106, %v281, 0
      %284 = vmatpush.msra.mxu0 0.0
      %285 = vmatpush.msra.mxu0 0.0
      %286 = vmatpush.msra.mxu0 0.0
      %287 = vmatpush.msra.mxu0 0.0
      %288 = vmatpush.msra.mxu0 0.0
      %289 = vmatpush.msra.mxu0 0.0
      %290 = vmatpush.msra.mxu0 0.0
      %291 = vmatpush.msra.mxu0 0.0
      %292 = vmatpush.msra.mxu0 %v213
      %293 = vmatpush.msra.mxu0 %v212
      %294 = vmatpush.msra.mxu0 %v211
      %295 = vmatpush.msra.mxu0 %v210
      %296 = vmatpush.msra.mxu0 %v209
      %297 = vmatpush.msra.mxu0 %v208
      %298 = vmatpush.msra.mxu0 %v207
      %299 = vmatpush.msra.mxu0 %v206
      %300 = vmatmul.f32.gmra.mxu0 %v282
      %v301 = vpop.f32.mrf.mxu0
      %v302 = vadd.f32 %v216, %v301
      %303 = vdwg.mxu0
      %v304 = vmax.f32 %v302, 0.0
      %v305 = vld [vmem:[%s3] sm:$0xf]
      %v306 = vld [vmem:[%s4] sm:$0x1]
      %v308 = vperm.slane %v306, 0
      %vm310 = vcmask 31744
      %v312 = vsel %vm310, %v304, 0
      %vm314 = vcmask 1043456
      %v316 = vsel %vm314, %v305, 0
      %318 = vmatpush.msra.mxu0 0.0
      %319 = vmatpush.msra.mxu0 0.0
      %320 = vmatpush.msra.mxu0 0.0
      %321 = vmatpush.msra.mxu0 0.0
      %322 = vmatpush.msra.mxu0 0.0
      %323 = vmatpush.msra.mxu0 0.0
      %324 = vmatpush.msra.mxu0 0.0
      %325 = vmatpush.msra.mxu0 0.0
      %326 = vmatpush.msra.mxu0 0.0
      %327 = vmatpush.msra.mxu0 0.0
      %328 = vmatpush.msra.mxu0 0.0
      %329 = vmatpush.msra.mxu0 0.0
      %330 = vmatpush.msra.mxu0 0.0
      %331 = vmatpush.msra.mxu0 0.0
      %332 = vmatpush.msra.mxu0 0.0
      %333 = vmatpush.msra.mxu0 %v316
      %334 = vmatmul.f32.gmra.mxu0 %v312
      %v335 = vpop.f32.mrf.mxu0
      %v336 = vadd.f32 %v308, %v335
      %337 = vdwg.mxu0
      %v338 = vxor.u32 %v336, 2147483648
      %v339 = vmul.f32 %v338, 1.442695
      %v340 = vpow.pop %v339
      %v341 = vadd.f32 %v340, 1.0
      %v342 = vrcp.pop %v341
      %v343 = vmul.f32 %v341, %v342
      %v344 = vsub.f32 1.0, %v343
      %v345 = vmul.f32 %v342, %v344
      %v346 = vadd.f32 %v342, %v345
      %vm347 = vweird.f32 %v341
      %vm348 = vweird.f32 %v342
      %vm349 = vmor %vm347, %vm348
      %v350 = vsel %vm349, %v342, %v346
      %v351 = vand.u32 2147483647, %v341
      %vm352 = vcmp.eq.f32.partialorder %v351, 8.507059e+37
      %v353 = vand.u32 %v341, 2147483648
      %v354 = vor.u32 1.1754944e-38, %v353
      %v355 = vsel %vm352, %v354, %v350
      %v356 = vmul.f32 1.0, %v355
      %vm357 = vcmask 517120
      %358 = vst.msk [vmem:[#allocation6] sm:$0x3] %vm357, %v356
    $region33: #{tpu_custom_call.1} parent=1 // pred_fallthru
      _
    // Predicated region
    $region34: #{tpu_custom_call.1} parent=1 // pred_check
      _
    $region35: #{tpu_custom_call.1} parent=1 // pred_check_branch
      %360 = sbr.rel (0) target = $region37
    $region36: #{tpu_custom_call.1} parent=1 // pred_region
      %362 = vsyncadd [#allocation5], 0
      %s364 = sshll.u32 [#allocation6], 4
      %s365 = int_to_ptr.vmem [resolvable:$true] %s364
      %s366 = sshll.u32 %s5, 4
      %s367 = int_to_ptr.hbm [resolvable:$true] %s366
      %369 = dma.vmem_to_hbm [thread:$0]  %s365, 32, %s367, [#allocation5]
    $region37: #{tpu_custom_call.1} parent=1 // pred_fallthru
      _
    // Predicated region
    $region38: #{tpu_custom_call.1} parent=1 // pred_check
      _
    $region39: #{tpu_custom_call.1} parent=1 // pred_check_branch
      %371 = sbr.rel (0) target = $region41
    $region40: #{tpu_custom_call.1} parent=1 // pred_region
      %373 = dma.done [#allocation5], 32
    $region41: #{tpu_custom_call.1} parent=1 // pred_fallthru
      _
    %374 = vsyncpa [#allocation4], 1
    %375 = vsyncpa [#allocation5], 1

</llo_original>
